<compile_context>
chip_gen: v7x
topology: tpu7x:2x2x1
jax: 0.10.0
libtpu: 0.0.40
codegen_flags: <defaults>
</compile_context>

<pallas_src>
import jax
import jax.numpy as jnp
from jax.experimental import pallas as pl
from jax.experimental.pallas import tpu as pltpu


def _round_up(x, n):
    return ((x + n - 1) // n) * n


# ---------------- prologue 1: branch MLP, tiled over B ----------------
def _branch_kernel(ux_ref, w1b_ref, b1b_ref, w2b_ref, b2b_ref, out_ref):
    h = jnp.dot(ux_ref[...], w1b_ref[...],
                preferred_element_type=jnp.float32) + b1b_ref[...]
    h = jnp.maximum(h, 0.0)
    out_ref[...] = jnp.dot(h, w2b_ref[...],
                           preferred_element_type=jnp.float32) + b2b_ref[...]


# -------- prologue 2: trunk MLP in transposed orientation, tiled over M --------
def _trunk_kernel(y_ref, w1t_ref, b1t_ref, w2tT_ref, b2t_ref, out_ref):
    # Layer 1 has contraction dim K=1: do it as a VPU rank-1 outer product
    # instead of an MXU matmul padded to K=128.
    h = w1t_ref[...] * y_ref[...] + b1t_ref[...]            # [H_pad,1]*[1,Mt] -> [H_pad, Mt]
    h = jnp.maximum(h, 0.0)
    t = jnp.dot(w2tT_ref[...], h,
                preferred_element_type=jnp.float32) + b2t_ref[...]   # [P_pad, Mt]
    out_ref[...] = jnp.maximum(t, 0.0)


# ---------------- main kernel: tiled canonical contraction ----------------
def _contract_kernel(branch_ref, trunkT_ref, bias_ref, out_ref):
    g = jnp.dot(branch_ref[...], trunkT_ref[...],
                preferred_element_type=jnp.float32)          # [Bt, P_pad] @ [P_pad, Mt]
    out_ref[...] = (g + bias_ref[0, 0]).astype(out_ref.dtype)


def deeponet_forward(ux, y_loc, params, *, b_tile=None, m_tile=None,
                     out_dtype=jnp.float32):
    """G_uy[b, m_loc] for ux:[B,m], y_loc:[M,1].

    params must come from prepare_params() (hidden/p padded to 128,
    trunk weights pre-transposed).
    """
    B, m = ux.shape
    M = y_loc.shape[0]

    H_pad = params["w1b"].shape[1]
    P_pad = params["w2b"].shape[1]

    # ---- tile selection -------------------------------------------------
    if b_tile is None:
        b_tile = min(256, _round_up(B, 8))
    if m_tile is None:
        M128 = _round_up(M, 128)
        m_tile = min(2048, M128)
        # Keep >= 2 blocks along M when M allows it so v7x's second
        # TensorCore is not idle (free on v5e/v6e).
        if m_tile == M128 and M128 >= 256:
            m_tile = _round_up(M128 // 2, 128)

    B_pad = _round_up(B, b_tile)
    M_pad = _round_up(M, m_tile)

    ux_p = jnp.pad(ux, ((0, B_pad - B), (0, 0))) if B_pad != B else ux
    # lane-dense [1, M_pad] row for the trunk
    y_row = jnp.pad(jnp.reshape(y_loc, (1, M)), ((0, 0), (0, M_pad - M)))

    const2 = lambda *_: (0, 0)

    # ---- branch: [B_pad, P_pad] -----------------------------------------
    branch = pl.pallas_call(
        _branch_kernel,
        out_shape=jax.ShapeDtypeStruct((B_pad, P_pad), jnp.float32),
        grid=(B_pad // b_tile,),
        in_specs=[
            pl.BlockSpec((b_tile, m), lambda i: (i, 0)),
            pl.BlockSpec(params["w1b"].shape, const2),
            pl.BlockSpec(params["b1b"].shape, const2),
            pl.BlockSpec(params["w2b"].shape, const2),
            pl.BlockSpec(params["b2b"].shape, const2),
        ],
        out_specs=pl.BlockSpec((b_tile, P_pad), lambda i: (i, 0)),
        compiler_params=pltpu.CompilerParams(dimension_semantics=("parallel",)),
    )(ux_p, params["w1b"], params["b1b"], params["w2b"], params["b2b"])

    # ---- trunk^T: [P_pad, M_pad] ----------------------------------------
    trunkT = pl.pallas_call(
        _trunk_kernel,
        out_shape=jax.ShapeDtypeStruct((P_pad, M_pad), jnp.float32),
        grid=(M_pad // m_tile,),
        in_specs=[
            pl.BlockSpec((1, m_tile), lambda j: (0, j)),
            pl.BlockSpec(params["w1t_col"].shape, const2),
            pl.BlockSpec(params["b1t_col"].shape, const2),
            pl.BlockSpec(params["w2tT"].shape, const2),
            pl.BlockSpec(params["b2t_col"].shape, const2),
        ],
        out_specs=pl.BlockSpec((P_pad, m_tile), lambda j: (0, j)),
        compiler_params=pltpu.CompilerParams(dimension_semantics=("parallel",)),
    )(y_row, params["w1t_col"], params["b1t_col"],
      params["w2tT"], params["b2t_col"])

    # ---- G = branch @ trunk^T + b  (the memory-bound [B, M] writeback) ---
    out = pl.pallas_call(
        _contract_kernel,
        out_shape=jax.ShapeDtypeStruct((B_pad, M_pad), out_dtype),
        grid=(B_pad // b_tile, M_pad // m_tile),
        in_specs=[
            pl.BlockSpec((b_tile, P_pad), lambda i, j: (i, 0)),
            pl.BlockSpec((P_pad, m_tile), lambda i, j: (0, j)),
            pl.BlockSpec((1, 1), lambda i, j: (0, 0),
                         memory_space=pltpu.MemorySpace.SMEM),
        ],
        out_specs=pl.BlockSpec((b_tile, m_tile), lambda i, j: (i, j)),
        compiler_params=pltpu.CompilerParams(
            dimension_semantics=("parallel", "parallel")),
    )(branch, trunkT, params["b"])

    # TODO(synk): padded columns carry garbage (trunk of padded y rows is nonzero);
    # slice them off here.  Pick tiles that divide B/M (or let the consumer read
    # the padded buffer) to avoid this extra copy on a memory-bound workload.
    return out[:B, :M]


# -------------------------- parameter handling --------------------------
def init_raw_params(key, m, hidden_dim, p):
    """PyTorch-layout-equivalent params: weights stored [in, out], biases [1, out]."""
    ks = jax.random.split(key, 9)

    def lin(k, fan_in, fan_out):
        scale = (2.0 / (fan_in + fan_out)) ** 0.5  # xavier-normal-ish
        return scale * jax.random.normal(k, (fan_in, fan_out), jnp.float32)

    return {
        # branch net: Linear(m,H) -> ReLU -> Linear(H,p)
        "w1b": lin(ks[0], m, hidden_dim),
        "b1b": 0.01 * jax.random.normal(ks[1], (1, hidden_dim), jnp.float32),
        "w2b": lin(ks[2], hidden_dim, p),
        "b2b": 0.01 * jax.random.normal(ks[3], (1, p), jnp.float32),
        # trunk net: Linear(1,H) -> ReLU -> Linear(H,p) -> ReLU
        "w1t": lin(ks[4], 1, hidden_dim),
        "b1t": 0.01 * jax.random.normal(ks[5], (1, hidden_dim), jnp.float32),
        "w2t": lin(ks[6], hidden_dim, p),
        "b2t": 0.01 * jax.random.normal(ks[7], (1, p), jnp.float32),
        # scalar output bias (torch.randn(1))
        "b": jax.random.normal(ks[8], (1, 1), jnp.float32),
    }


def prepare_params(raw):
    """Pad hidden_dim / p up to 128 (lane-dense, exact: zero padding) and
    pre-transpose the trunk weights so the kernel never transposes."""
    _, H = raw["w1b"].shape
    _, P = raw["w2b"].shape
    H_pad = _round_up(H, 128)
    P_pad = _round_up(P, 128)
    dH, dP = H_pad - H, P_pad - P
    return {
        # branch (x @ W orientation)
        "w1b": jnp.pad(raw["w1b"], ((0, 0), (0, dH))),
        "b1b": jnp.pad(raw["b1b"], ((0, 0), (0, dH))),
        "w2b": jnp.pad(raw["w2b"], ((0, dH), (0, dP))),
        "b2b": jnp.pad(raw["b2b"], ((0, 0), (0, dP))),
        # trunk in transposed orientation (column biases + W2^T)
        "w1t_col": jnp.pad(raw["w1t"].T, ((0, dH), (0, 0))),   # [H_pad, 1]
        "b1t_col": jnp.pad(raw["b1t"].T, ((0, dH), (0, 0))),   # [H_pad, 1]
        "w2tT":    jnp.pad(raw["w2t"].T, ((0, dP), (0, dH))),  # [P_pad, H_pad]
        "b2t_col": jnp.pad(raw["b2t"].T, ((0, dP), (0, 0))),   # [P_pad, 1]
        "b": raw["b"],
    }


def reference_forward(ux, y_loc, raw):
    h_b = jnp.maximum(ux @ raw["w1b"] + raw["b1b"], 0.0)
    branch = h_b @ raw["w2b"] + raw["b2b"]
    h_t = jnp.maximum(y_loc @ raw["w1t"] + raw["b1t"], 0.0)
    trunk = jnp.maximum(h_t @ raw["w2t"] + raw["b2t"], 0.0)
    return jnp.einsum("bp,mp->bm", branch, trunk) + raw["b"][0, 0]


if __name__ == "__main__":
    # Small shapes consistent with DeepONet_ZL(m, n_yloc, out_dim=2, p=32, hidden_dim=32)
    B, m, hidden_dim, p_dim, n_yloc = 2, 32, 32, 32, 8

    key = jax.random.PRNGKey(0)
    k_ux, k_y, k_params, k_ux2, k_y2 = jax.random.split(key, 5)

    ux = jax.random.normal(k_ux, (B, m), jnp.float32)            # branch input [B, m]
    y_loc = jax.random.uniform(k_y, (n_yloc, 1), jnp.float32)    # trunk input  [M, 1]

    raw = init_raw_params(k_params, m, hidden_dim, p_dim)
    params = prepare_params(raw)

    # --- toy-size run (default tiles; single grid step after padding) ---
    out = deeponet_forward(ux, y_loc, params)
    out = jax.block_until_ready(out)
    ref = reference_forward(ux, y_loc, raw)
    assert out.shape == (B, n_yloc)
    assert jnp.max(jnp.abs(out - ref)) < 1e-4

    # --- exercise the multi-tile grid + padding path with odd sizes ---
    B2, M2 = 20, 300
    ux2 = jax.random.normal(k_ux2, (B2, m), jnp.float32)
    y2 = jax.random.uniform(k_y2, (M2, 1), jnp.float32)

    # default tiles (m_tile auto-split so the M axis has >= 2 blocks)
    out2 = deeponet_forward(ux2, y2, params)
    out2 = jax.block_until_ready(out2)
    ref2 = reference_forward(ux2, y2, raw)
    assert out2.shape == (B2, M2)
    assert jnp.max(jnp.abs(out2 - ref2)) < 1e-4

    # explicit small tiles (many grid steps on both axes)
    out3 = deeponet_forward(ux2, y2, params, b_tile=8, m_tile=128)
    out3 = jax.block_until_ready(out3)
    assert jnp.max(jnp.abs(out3 - ref2)) < 1e-4

    print("KERNEL_OK")
</pallas_src>

<mosaic_0001>
module attributes {stable_mosaic.version = 11 : i64} {
  func.func @_branch_kernel(%arg0: i32, %arg1: memref<8x32xf32, #tpu.memory_space<vmem>>, %arg2: memref<32x128xf32, #tpu.memory_space<vmem>>, %arg3: memref<1x128xf32, #tpu.memory_space<vmem>>, %arg4: memref<128x128xf32, #tpu.memory_space<vmem>>, %arg5: memref<1x128xf32, #tpu.memory_space<vmem>>, %arg6: memref<8x128xf32, #tpu.memory_space<vmem>>) attributes {dimension_semantics = [#tpu.dimension_semantics<parallel>], iteration_bounds = array<i64: 1>, scalar_prefetch = 0 : i64, scratch_operands = 0 : i64, tpu.core_type = #tpu.core_type<tc>, window_params = [{transform_indices = @transform_0, window_bounds = array<i64: 8, 32>}, {pipeline_mode = #tpu.pipeline_mode<synchronous>, transform_indices = @transform_1, window_bounds = array<i64: 32, 128>}, {pipeline_mode = #tpu.pipeline_mode<synchronous>, transform_indices = @transform_2, window_bounds = array<i64: 1, 128>}, {pipeline_mode = #tpu.pipeline_mode<synchronous>, transform_indices = @transform_3, window_bounds = array<i64: 128, 128>}, {pipeline_mode = #tpu.pipeline_mode<synchronous>, transform_indices = @transform_4, window_bounds = array<i64: 1, 128>}, {transform_indices = @transform_5, window_bounds = array<i64: 8, 128>}]} {
    %c0 = arith.constant 0 : index
    %c0_0 = arith.constant 0 : index
    %0 = vector.load %arg1[%c0, %c0_0] : memref<8x32xf32, #tpu.memory_space<vmem>>, vector<8x32xf32>
    %c0_1 = arith.constant 0 : index
    %c0_2 = arith.constant 0 : index
    %1 = vector.load %arg2[%c0_1, %c0_2] : memref<32x128xf32, #tpu.memory_space<vmem>>, vector<32x128xf32>
    %cst = arith.constant dense<0.000000e+00> : vector<8x128xf32>
    %2 = tpu.matmul %0, %1, %cst {dimension_numbers = #tpu.dot_dimension_numbers<[1], [0], [0], [1], [0, 0, 1, 1], [], []>} : vector<8x32xf32>, vector<32x128xf32>, vector<8x128xf32> -> vector<8x128xf32>
    %c0_3 = arith.constant 0 : index
    %c0_4 = arith.constant 0 : index
    %3 = vector.load %arg3[%c0_3, %c0_4] : memref<1x128xf32, #tpu.memory_space<vmem>>, vector<1x128xf32>
    %4 = vector.broadcast %3 : vector<1x128xf32> to vector<8x128xf32>
    %5 = arith.addf %2, %4 : vector<8x128xf32>
    %cst_5 = arith.constant 0.000000e+00 : f32
    %6 = vector.broadcast %cst_5 : f32 to vector<8x128xf32>
    %7 = arith.maximumf %5, %6 : vector<8x128xf32>
    %c0_6 = arith.constant 0 : index
    %c0_7 = arith.constant 0 : index
    %8 = vector.load %arg4[%c0_6, %c0_7] : memref<128x128xf32, #tpu.memory_space<vmem>>, vector<128x128xf32>
    %cst_8 = arith.constant dense<0.000000e+00> : vector<8x128xf32>
    %9 = tpu.matmul %7, %8, %cst_8 {dimension_numbers = #tpu.dot_dimension_numbers<[1], [0], [0], [1], [0, 0, 1, 1], [], []>} : vector<8x128xf32>, vector<128x128xf32>, vector<8x128xf32> -> vector<8x128xf32>
    %c0_9 = arith.constant 0 : index
    %c0_10 = arith.constant 0 : index
    %10 = vector.load %arg5[%c0_9, %c0_10] : memref<1x128xf32, #tpu.memory_space<vmem>>, vector<1x128xf32>
    %11 = vector.broadcast %10 : vector<1x128xf32> to vector<8x128xf32>
    %12 = arith.addf %9, %11 : vector<8x128xf32>
    %c0_11 = arith.constant 0 : index
    %c0_12 = arith.constant 0 : index
    %13 = vector.load %arg6[%c0_11, %c0_12] : memref<8x128xf32, #tpu.memory_space<vmem>>, vector<8x128xf32>
    tpu.vector_store %arg6[%c0_11, %c0_12], %12 {strides = array<i32>} : memref<8x128xf32, #tpu.memory_space<vmem>>, vector<8x128xf32>,
    return
  }
  func.func @transform_0(%arg0: i32) -> (i32, i32) {
    %c0_i32 = arith.constant 0 : i32
    %c0_i32_0 = arith.constant 0 : i32
    return %arg0, %c0_i32 : i32, i32
  }
  func.func @transform_1(%arg0: i32) -> (i32, i32) {
    %c0_i32 = arith.constant 0 : i32
    %c0_i32_0 = arith.constant 0 : i32
    %c0_i32_1 = arith.constant 0 : i32
    return %c0_i32, %c0_i32_0 : i32, i32
  }
  func.func @transform_2(%arg0: i32) -> (i32, i32) {
    %c0_i32 = arith.constant 0 : i32
    %c0_i32_0 = arith.constant 0 : i32
    %c0_i32_1 = arith.constant 0 : i32
    return %c0_i32, %c0_i32_0 : i32, i32
  }
  func.func @transform_3(%arg0: i32) -> (i32, i32) {
    %c0_i32 = arith.constant 0 : i32
    %c0_i32_0 = arith.constant 0 : i32
    %c0_i32_1 = arith.constant 0 : i32
    return %c0_i32, %c0_i32_0 : i32, i32
  }
  func.func @transform_4(%arg0: i32) -> (i32, i32) {
    %c0_i32 = arith.constant 0 : i32
    %c0_i32_0 = arith.constant 0 : i32
    %c0_i32_1 = arith.constant 0 : i32
    return %c0_i32, %c0_i32_0 : i32, i32
  }
  func.func @transform_5(%arg0: i32) -> (i32, i32) {
    %c0_i32 = arith.constant 0 : i32
    %c0_i32_0 = arith.constant 0 : i32
    return %arg0, %c0_i32 : i32, i32
  }
}

</mosaic_0001>

<llo_original>
// kernel: tpu_custom_call.1
$region0: #{tpu_custom_call.1}
  #allocation0 [shape = 'u32[]', space=smem, size = 0x4, offset = 0x4, fixed_abs, tag = 'smem constant byte address 0x4 - core index']
  #allocation1 [shape = 'u32[144,128]{1,0:T(1,128)}', space=vmem, size = 0x12000, scoped, tag = 'internal scratch']
  %s0 = inlined_call_operand.hbm [shape: f32[8,32], index: 0, kind: input, shape index: {}]
  %s1 = inlined_call_operand.hbm [shape: f32[32,128], index: 1, kind: input, shape index: {}]
  %s2 = inlined_call_operand.vmem [shape: f32[1,128], index: 2, kind: input, shape index: {}]
  %s3 = inlined_call_operand.hbm [shape: f32[128,128], index: 3, kind: input, shape index: {}]
  %s4 = inlined_call_operand.vmem [shape: f32[1,128], index: 4, kind: input, shape index: {}]
  %s5 = inlined_call_operand.hbm [shape: f32[8,128], index: 5, kind: output, shape index: {}]
  %s6 = sld [smem:[#allocation0]]
  $region42: #{tpu_custom_call.1} parent=0
    _
  %s8 = ssub.s32 1, %s6
  %s9 = scalar_select 0, %s8, %s6
  $region1: #{tpu_custom_call.1} parent=0
    #allocation2 [shape = 'u8[4096]{0}', space=vmem, size = 0x1000, scoped, tag = 'input window, operand 0, single buffered']
    #allocation3 [shape = 's32[1]{0}', space=sflag, size = 0x4, scoped, tag = 'scoped memory for tpu_custom_call.1']
    #allocation4 [shape = 's32[1]{0}', space=sflag, size = 0x4, scoped, tag = 'scoped memory for tpu_custom_call.1']
    #allocation5 [shape = 'u8[16384]{0}', space=vmem, size = 0x4000, scoped, tag = 'input window, operand 1, single buffered']
    #allocation6 [shape = 's32[1]{0}', space=sflag, size = 0x4, scoped, tag = 'scoped memory for tpu_custom_call.1']
    #allocation7 [shape = 'u8[65536]{0}', space=vmem, size = 0x10000, scoped, tag = 'input window, operand 3, single buffered']
    #allocation8 [shape = 'u8[4096]{0}', space=vmem, size = 0x1000, scoped, tag = 'output window, operand 0, single buffered']
    %10 = vsyncpa [#allocation3], 0
    %11 = vsyncpa [#allocation6], 0
    %12 = vsyncpa [#allocation4], 0
    // Predicated region
    $region2: #{tpu_custom_call.1} parent=1 // pred_check
      _
    $region3: #{tpu_custom_call.1} parent=1 // pred_check_branch
      %14 = sbr.rel (0) target = $region5
    $region4: #{tpu_custom_call.1} parent=1 // pred_region
      %s16 = ssub.s32 128, 128
      %17 = vsyncadd [#allocation3], %s16
      %s19 = sshll.u32 [#allocation2], 4
      %s20 = int_to_ptr.vmem [resolvable:$true] %s19
      %22 = dma.hbm_to_vmem [thread:$0]  %s0, 128, %s20, [#allocation3]
    $region5: #{tpu_custom_call.1} parent=1 // pred_fallthru
      _
    // Predicated region
    $region6: #{tpu_custom_call.1} parent=1 // pred_check
      _
    $region7: #{tpu_custom_call.1} parent=1 // pred_check_branch
      %24 = sbr.rel (0) target = $region9
    $region8: #{tpu_custom_call.1} parent=1 // pred_region
      %s26 = ssub.s32 512, 512
      %27 = vsyncadd [#allocation6], %s26
      %s28 = sshll.u32 [#allocation5], 4
      %s29 = int_to_ptr.vmem [resolvable:$true] %s28
      %34 = dma.hbm_to_vmem [thread:$0]  %s1, 512, %s29, [#allocation6], 128, 128, 8
    $region9: #{tpu_custom_call.1} parent=1 // pred_fallthru
      _
    // Predicated region
    $region10: #{tpu_custom_call.1} parent=1 // pred_check
      _
    $region11: #{tpu_custom_call.1} parent=1 // pred_check_branch
      %36 = sbr.rel (0) target = $region13
    $region12: #{tpu_custom_call.1} parent=1 // pred_region
      _
    $region13: #{tpu_custom_call.1} parent=1 // pred_fallthru
      _
    // Predicated region
    $region14: #{tpu_custom_call.1} parent=1 // pred_check
      _
    $region15: #{tpu_custom_call.1} parent=1 // pred_check_branch
      %38 = sbr.rel (0) target = $region17
    $region16: #{tpu_custom_call.1} parent=1 // pred_region
      %s40 = ssub.s32 2048, 2048
      %41 = vsyncadd [#allocation6], %s40
      %s42 = sshll.u32 [#allocation7], 4
      %s43 = int_to_ptr.vmem [resolvable:$true] %s42
      %48 = dma.hbm_to_vmem [thread:$0]  %s3, 2048, %s43, [#allocation6], 128, 128, 8
    $region17: #{tpu_custom_call.1} parent=1 // pred_fallthru
      _
    // Predicated region
    $region18: #{tpu_custom_call.1} parent=1 // pred_check
      _
    $region19: #{tpu_custom_call.1} parent=1 // pred_check_branch
      %50 = sbr.rel (0) target = $region21
    $region20: #{tpu_custom_call.1} parent=1 // pred_region
      _
    $region21: #{tpu_custom_call.1} parent=1 // pred_fallthru
      _
    // Predicated region
    $region22: #{tpu_custom_call.1} parent=1 // pred_check
      _
    $region23: #{tpu_custom_call.1} parent=1 // pred_check_branch
      %52 = sbr.rel (0) target = $region25
    $region24: #{tpu_custom_call.1} parent=1 // pred_region
      %53 = dma.done [#allocation3], 128
    $region25: #{tpu_custom_call.1} parent=1 // pred_fallthru
      _
    // Predicated region
    $region26: #{tpu_custom_call.1} parent=1 // pred_check
      _
    $region27: #{tpu_custom_call.1} parent=1 // pred_check_branch
      %55 = sbr.rel (0) target = $region29
    $region28: #{tpu_custom_call.1} parent=1 // pred_region
      %56 = dma.done [#allocation6], 512
    $region29: #{tpu_custom_call.1} parent=1 // pred_fallthru
      _
    // Predicated region
    $region30: #{tpu_custom_call.1} parent=1 // pred_check
      _
    $region31: #{tpu_custom_call.1} parent=1 // pred_check_branch
      %58 = sbr.rel (0) target = $region33
    $region32: #{tpu_custom_call.1} parent=1 // pred_region
      %59 = dma.done [#allocation6], 2048
    $region33: #{tpu_custom_call.1} parent=1 // pred_fallthru
      _
    %v60 = vld [vmem:[#allocation2] sm:$0xff]
    %v61 = vld [vmem:[#allocation5] sm:$0xff]
    %v62 = vld [vmem:[#allocation5 + $0x8] sm:$0xff]
    %v63 = vld [vmem:[#allocation5 + $0x10] sm:$0xff]
    %v64 = vld [vmem:[#allocation5 + $0x18] sm:$0xff]
    %v65 = vld [vmem:[%s2] sm:$0x1]
    %v67 = vlaneseq
    %v68 = vshrl.u32 %v67, 7
    %v69 = vsub.s32 0, %v68
    %v70 = vrot.slane %v65, %v69
    %vm72 = vcmask 261120
    %v74 = vsel %vm72, %v60, 0
    %76 = vmatprep.subr.mxu0 0.0
    %77 = vmatpush1.msra.mxu0 %v61
    %78 = vmatprep.subr.mxu0 0.0
    %79 = vmatpush1.msra.mxu0 %v62
    %80 = vmatprep.subr.mxu0 0.0
    %81 = vmatpush1.msra.mxu0 %v63
    %82 = vmatprep.subr.mxu0 0.0
    %83 = vmatpush1.msra.mxu0 %v64
    %84 = vmatprep.subr.mxu0 0.0
    %85 = vmatpush1.msra.mxu0 0.0
    %86 = vmatprep.subr.mxu0 0.0
    %87 = vmatpush1.msra.mxu0 0.0
    %88 = vmatprep.subr.mxu0 0.0
    %89 = vmatpush1.msra.mxu0 0.0
    %90 = vmatprep.subr.mxu0 0.0
    %91 = vmatpush1.msra.mxu0 0.0
    %92 = vmatprep.subr.mxu0 0.0
    %93 = vmatpush1.msra.mxu0 0.0
    %94 = vmatprep.subr.mxu0 0.0
    %95 = vmatpush1.msra.mxu0 0.0
    %96 = vmatprep.subr.mxu0 0.0
    %97 = vmatpush1.msra.mxu0 0.0
    %98 = vmatprep.subr.mxu0 0.0
    %99 = vmatpush1.msra.mxu0 0.0
    %100 = vmatprep.subr.mxu0 0.0
    %101 = vmatpush1.msra.mxu0 0.0
    %102 = vmatprep.subr.mxu0 0.0
    %103 = vmatpush1.msra.mxu0 0.0
    %104 = vmatprep.subr.mxu0 0.0
    %105 = vmatpush1.msra.mxu0 0.0
    %106 = vmatprep.subr.mxu0 0.0
    %107 = vmatpush1.msra.mxu0 0.0
    %108 = vmatprep.subr.mxu0 0.0
    %109 = vmatpush1.msra.mxu0 0.0
    %110 = vmatprep.subr.mxu0 0.0
    %111 = vmatpush1.msra.mxu0 0.0
    %112 = vmatprep.subr.mxu0 0.0
    %113 = vmatpush1.msra.mxu0 0.0
    %114 = vmatprep.subr.mxu0 0.0
    %115 = vmatpush1.msra.mxu0 0.0
    %116 = vmatprep.subr.mxu0 0.0
    %117 = vmatpush1.msra.mxu0 0.0
    %118 = vmatprep.subr.mxu0 0.0
    %119 = vmatpush1.msra.mxu0 0.0
    %120 = vmatprep.subr.mxu0 0.0
    %121 = vmatpush1.msra.mxu0 0.0
    %122 = vmatprep.subr.mxu0 0.0
    %123 = vmatpush1.msra.mxu0 0.0
    %124 = vmatprep.subr.mxu0 0.0
    %125 = vmatpush1.msra.mxu0 0.0
    %126 = vmatprep.subr.mxu0 0.0
    %127 = vmatpush1.msra.mxu0 0.0
    %128 = vmatprep.subr.mxu0 0.0
    %129 = vmatpush1.msra.mxu0 0.0
    %130 = vmatprep.subr.mxu0 0.0
    %131 = vmatpush1.msra.mxu0 0.0
    %132 = vmatprep.subr.mxu0 0.0
    %133 = vmatpush1.msra.mxu0 0.0
    %134 = vmatprep.subr.mxu0 0.0
    %135 = vmatpush1.msra.mxu0 0.0
    %136 = vmatprep.subr.mxu0 0.0
    %137 = vmatpush1.msra.mxu0 0.0
    %138 = vmatprep.subr.mxu0 0.0
    %139 = vmatpush1.msra.mxu0 0.0
    %140 = vmatprep.mubr.f32.mxu0 0.0
    %141 = vmatmul.mubr.f32.gmra.mrb[0].mxu0 %v74
    %v142 = vpop.f32.mrb[0].mxu0
    %v143 = vadd.f32 %v70, %v142
    %v144 = vpop.f32.mrb[0].mxu0
    %145 = vdwg.mxu0
    %v146 = vmax.f32 %v143, 0.0
    %v147 = vld [vmem:[#allocation7] sm:$0xff]
    %v148 = vld [vmem:[#allocation7 + $0x8] sm:$0xff]
    %v149 = vld [vmem:[#allocation7 + $0x10] sm:$0xff]
    %v150 = vld [vmem:[#allocation7 + $0x18] sm:$0xff]
    %v151 = vld [vmem:[#allocation7 + $0x20] sm:$0xff]
    %v152 = vld [vmem:[#allocation7 + $0x28] sm:$0xff]
    %v153 = vld [vmem:[#allocation7 + $0x30] sm:$0xff]
    %v154 = vld [vmem:[#allocation7 + $0x38] sm:$0xff]
    %v155 = vld [vmem:[#allocation7 + $0x40] sm:$0xff]
    %v156 = vld [vmem:[#allocation7 + $0x48] sm:$0xff]
    %v157 = vld [vmem:[#allocation7 + $0x50] sm:$0xff]
    %v158 = vld [vmem:[#allocation7 + $0x58] sm:$0xff]
    %v159 = vld [vmem:[#allocation7 + $0x60] sm:$0xff]
    %v160 = vld [vmem:[#allocation7 + $0x68] sm:$0xff]
    %v161 = vld [vmem:[#allocation7 + $0x70] sm:$0xff]
    %v162 = vld [vmem:[#allocation7 + $0x78] sm:$0xff]
    %v163 = vld [vmem:[%s4] sm:$0x1]
    %v165 = vlaneseq
    %v166 = vshrl.u32 %v165, 7
    %v167 = vsub.s32 0, %v166
    %v168 = vrot.slane %v163, %v167
    %170 = vmatprep.subr.mxu0 0.0
    %171 = vmatpush1.msra.mxu0 %v147
    %172 = vmatprep.subr.mxu0 0.0
    %173 = vmatpush1.msra.mxu0 %v148
    %174 = vmatprep.subr.mxu0 0.0
    %175 = vmatpush1.msra.mxu0 %v149
    %176 = vmatprep.subr.mxu0 0.0
    %177 = vmatpush1.msra.mxu0 %v150
    %178 = vmatprep.subr.mxu0 0.0
    %179 = vmatpush1.msra.mxu0 %v151
    %180 = vmatprep.subr.mxu0 0.0
    %181 = vmatpush1.msra.mxu0 %v152
    %182 = vmatprep.subr.mxu0 0.0
    %183 = vmatpush1.msra.mxu0 %v153
    %184 = vmatprep.subr.mxu0 0.0
    %185 = vmatpush1.msra.mxu0 %v154
    %186 = vmatprep.subr.mxu0 0.0
    %187 = vmatpush1.msra.mxu0 %v155
    %188 = vmatprep.subr.mxu0 0.0
    %189 = vmatpush1.msra.mxu0 %v156
    %190 = vmatprep.subr.mxu0 0.0
    %191 = vmatpush1.msra.mxu0 %v157
    %192 = vmatprep.subr.mxu0 0.0
    %193 = vmatpush1.msra.mxu0 %v158
    %194 = vmatprep.subr.mxu0 0.0
    %195 = vmatpush1.msra.mxu0 %v159
    %196 = vmatprep.subr.mxu0 0.0
    %197 = vmatpush1.msra.mxu0 %v160
    %198 = vmatprep.subr.mxu0 0.0
    %199 = vmatpush1.msra.mxu0 %v161
    %200 = vmatprep.subr.mxu0 0.0
    %201 = vmatpush1.msra.mxu0 %v162
    %202 = vmatprep.subr.mxu0 0.0
    %203 = vmatpush1.msra.mxu0 0.0
    %204 = vmatprep.subr.mxu0 0.0
    %205 = vmatpush1.msra.mxu0 0.0
    %206 = vmatprep.subr.mxu0 0.0
    %207 = vmatpush1.msra.mxu0 0.0
    %208 = vmatprep.subr.mxu0 0.0
    %209 = vmatpush1.msra.mxu0 0.0
    %210 = vmatprep.subr.mxu0 0.0
    %211 = vmatpush1.msra.mxu0 0.0
    %212 = vmatprep.subr.mxu0 0.0
    %213 = vmatpush1.msra.mxu0 0.0
    %214 = vmatprep.subr.mxu0 0.0
    %215 = vmatpush1.msra.mxu0 0.0
    %216 = vmatprep.subr.mxu0 0.0
    %217 = vmatpush1.msra.mxu0 0.0
    %218 = vmatprep.subr.mxu0 0.0
    %219 = vmatpush1.msra.mxu0 0.0
    %220 = vmatprep.subr.mxu0 0.0
    %221 = vmatpush1.msra.mxu0 0.0
    %222 = vmatprep.subr.mxu0 0.0
    %223 = vmatpush1.msra.mxu0 0.0
    %224 = vmatprep.subr.mxu0 0.0
    %225 = vmatpush1.msra.mxu0 0.0
    %226 = vmatprep.subr.mxu0 0.0
    %227 = vmatpush1.msra.mxu0 0.0
    %228 = vmatprep.subr.mxu0 0.0
    %229 = vmatpush1.msra.mxu0 0.0
    %230 = vmatprep.subr.mxu0 0.0
    %231 = vmatpush1.msra.mxu0 0.0
    %232 = vmatprep.subr.mxu0 0.0
    %233 = vmatpush1.msra.mxu0 0.0
    %234 = vmatprep.mubr.f32.mxu0 0.0
    %235 = vmatmul.mubr.f32.gmra.mrb[0].mxu0 %v146
    %v236 = vpop.f32.mrb[0].mxu0
    %v237 = vadd.f32 %v168, %v236
    %v238 = vpop.f32.mrb[0].mxu0
    %239 = vdwg.mxu0
    %240 = vst [vmem:[#allocation8] sm:$0xff] %v237
    // Predicated region
    $region34: #{tpu_custom_call.1} parent=1 // pred_check
      _
    $region35: #{tpu_custom_call.1} parent=1 // pred_check_branch
      %242 = sbr.rel (0) target = $region37
    $region36: #{tpu_custom_call.1} parent=1 // pred_region
      %s244 = ssub.s32 128, 128
      %245 = vsyncadd [#allocation4], %s244
      %s247 = sshll.u32 [#allocation8], 4
      %s248 = int_to_ptr.vmem [resolvable:$true] %s247
      %250 = dma.vmem_to_hbm [thread:$0]  %s248, 128, %s5, [#allocation4]
    $region37: #{tpu_custom_call.1} parent=1 // pred_fallthru
      _
    // Predicated region
    $region38: #{tpu_custom_call.1} parent=1 // pred_check
      _
    $region39: #{tpu_custom_call.1} parent=1 // pred_check_branch
      %252 = sbr.rel (0) target = $region41
    $region40: #{tpu_custom_call.1} parent=1 // pred_region
      %253 = dma.done [#allocation4], 128
    $region41: #{tpu_custom_call.1} parent=1 // pred_fallthru
      _
    %254 = vsyncpa [#allocation3], 1
    %255 = vsyncpa [#allocation6], 1
    %256 = vsyncpa [#allocation4], 1

</llo_original>
